<compile_context>
chip_gen: v7x
topology: tpu7x:2x2x1
jax: 0.10.0
libtpu: 0.0.40
codegen_flags: <defaults>
</compile_context>

<pallas_src>
import functools

import jax
import jax.numpy as jnp
from jax.experimental import pallas as pl
from jax.experimental.pallas import tpu as pltpu

_LANE = 128


def _round_up(x, m):
    return ((x + m - 1) // m) * m


def _lipswish(y):
    # 0.909 * y * sigmoid(y), with sigmoid(y) = 0.5 + 0.5*tanh(0.5*y):
    # a single EUP transcendental per element (vs exp + divide).
    return y * (0.909 * (0.5 + 0.5 * jnp.tanh(0.5 * y)))


def _mlp_fused_kernel(*refs, n_hidden, use_tanh, w_dtype):
    """refs = (x, w_first, [w_hidden], b_stack, w_last, b_last, out).

    Chains all layers in VMEM; intermediates never leave the core. Matmuls
    accumulate in f32 on the MXU; bias/activation math stays in f32."""
    if n_hidden > 0:
        x_ref, w0_ref, wh_ref, bstk_ref, wlast_ref, blast_ref, o_ref = refs
    else:
        x_ref, w0_ref, bstk_ref, wlast_ref, blast_ref, o_ref = refs
        wh_ref = None

    h = x_ref[...].astype(w_dtype)

    # First layer: (tile_b, in) @ (in, mlp_pad)
    y = jnp.dot(h, w0_ref[...], preferred_element_type=jnp.float32)
    y = y + bstk_ref[0]          # (1, mlp_pad) broadcasts over rows
    y = _lipswish(y)

    # Hidden layers: (tile_b, mlp_pad) @ (mlp_pad, mlp_pad)
    for i in range(n_hidden):
        y = jnp.dot(y.astype(w_dtype), wh_ref[i],
                    preferred_element_type=jnp.float32)
        y = y + bstk_ref[i + 1]
        y = _lipswish(y)

    # Final layer: (tile_b, mlp_pad) @ (mlp_pad, out_pad)
    y = jnp.dot(y.astype(w_dtype), wlast_ref[...],
                preferred_element_type=jnp.float32)
    y = y + blast_ref[...]
    if use_tanh:
        y = jnp.tanh(y)
    o_ref[...] = y.astype(o_ref.dtype)


def init_mlp_params(key, in_size, out_size, mlp_size, num_layers):
    """Init mirroring the PyTorch module's layer shapes.
    Layers: Linear(in, mlp), [Linear(mlp, mlp)] * (num_layers - 1),
            Linear(mlp, out).  Weights stored as (fan_in, fan_out)."""
    dims = [in_size] + [mlp_size] * num_layers + [out_size]
    params = []
    for i in range(len(dims) - 1):
        fan_in, fan_out = dims[i], dims[i + 1]
        key, kw, kb = jax.random.split(key, 3)
        bound = 1.0 / jnp.sqrt(fan_in)
        w = jax.random.uniform(kw, (fan_in, fan_out), jnp.float32, -bound, bound)
        b = jax.random.uniform(kb, (fan_out,), jnp.float32, -bound, bound)
        params.append((w, b))
    return params


def prepare_padded_params(params, param_dtype=jnp.float32, lane=_LANE):
    """One-time packing + zero-padding so every matmul output is lane-dense
    (last dim a multiple of 128) and the kernel only takes a handful of
    arrays.  Padded rows/cols are zero, so real outputs are unchanged and
    padded activations stay exactly 0.

    Returns a dict with:
      w_first  : (in_size, mlp_pad)            param_dtype
      w_hidden : (n_hidden, mlp_pad, mlp_pad)  param_dtype (absent if n_hidden==0)
      b_stack  : (num_layers, 1, mlp_pad)      float32 (first + hidden biases)
      w_last   : (mlp_pad, out_pad)            param_dtype
      b_last   : (1, out_pad)                  float32
    """
    n = len(params)                 # = num_layers + 1 linear layers
    num_layers = n - 1
    n_hidden = num_layers - 1
    in_size, mlp_size = params[0][0].shape
    out_size = params[-1][0].shape[1]
    mlp_pad = _round_up(mlp_size, lane)
    out_pad = _round_up(out_size, lane)

    w_first = (jnp.zeros((in_size, mlp_pad), jnp.float32)
               .at[:, :mlp_size].set(params[0][0]).astype(param_dtype))

    b_stack = jnp.zeros((num_layers, 1, mlp_pad), jnp.float32)
    b_stack = b_stack.at[0, 0, :mlp_size].set(params[0][1])

    packed = {"w_first": w_first}

    if n_hidden > 0:
        w_hidden = jnp.zeros((n_hidden, mlp_pad, mlp_pad), jnp.float32)
        for i in range(n_hidden):
            w_hidden = w_hidden.at[i, :mlp_size, :mlp_size].set(params[1 + i][0])
            b_stack = b_stack.at[1 + i, 0, :mlp_size].set(params[1 + i][1])
        packed["w_hidden"] = w_hidden.astype(param_dtype)

    packed["b_stack"] = b_stack
    packed["w_last"] = (jnp.zeros((mlp_pad, out_pad), jnp.float32)
                        .at[:mlp_size, :out_size].set(params[-1][0])
                        .astype(param_dtype))
    packed["b_last"] = (jnp.zeros((1, out_pad), jnp.float32)
                        .at[0, :out_size].set(params[-1][1]))
    packed["meta"] = dict(n_hidden=n_hidden, out_size=out_size)
    return packed


def mlp_forward(packed, x, *, tanh, tile_b=128, return_padded=False):
    """Single fused pallas_call over a batch-tiled grid.  Weights/biases are
    VMEM-resident (constant index_map); x/out tiles are pipelined."""
    B, in_size = x.shape
    n_hidden = packed["meta"]["n_hidden"]
    out_size = packed["meta"]["out_size"]
    out_pad = packed["w_last"].shape[1]

    # Batch tile: multiple of 8 sublanes, pad B so the grid divides evenly.
    tile_b = min(tile_b, _round_up(B, 8))
    b_pad = _round_up(B, tile_b)
    if b_pad != B:
        x = jnp.zeros((b_pad, in_size), x.dtype).at[:B].set(x)
    grid = (b_pad // tile_b,)

    const2 = lambda i: (0, 0)
    const3 = lambda i: (0, 0, 0)

    in_specs = [pl.BlockSpec((tile_b, in_size), lambda i: (i, 0)),
                pl.BlockSpec(packed["w_first"].shape, const2)]
    args = [x, packed["w_first"]]
    if n_hidden > 0:
        in_specs.append(pl.BlockSpec(packed["w_hidden"].shape, const3))
        args.append(packed["w_hidden"])
    in_specs += [pl.BlockSpec(packed["b_stack"].shape, const3),
                 pl.BlockSpec(packed["w_last"].shape, const2),
                 pl.BlockSpec(packed["b_last"].shape, const2)]
    args += [packed["b_stack"], packed["w_last"], packed["b_last"]]

    out_specs = pl.BlockSpec((tile_b, out_pad), lambda i: (i, 0))

    kernel = functools.partial(
        _mlp_fused_kernel, n_hidden=n_hidden, use_tanh=tanh,
        w_dtype=packed["w_first"].dtype)

    out = pl.pallas_call(
        kernel,
        out_shape=jax.ShapeDtypeStruct((b_pad, out_pad), x.dtype),
        grid=grid,
        in_specs=in_specs,
        out_specs=out_specs,
        compiler_params=pltpu.CompilerParams(
            dimension_semantics=("parallel",),        # shard batch over v7x's 2 TCs
            vmem_limit_bytes=32 * 1024 * 1024),        # safe on v7x (64 MiB physical)
    )(*args)

    if return_padded and b_pad == B:
        return out                       # lane-dense (B, out_pad) slab, no HBM re-slice
    return out[:B, :out_size]


def mlp_reference(params, x, tanh):
    """Pure-JAX reference (unpadded f32 params) for sanity checking."""
    n = len(params)
    h = x
    for idx, (w, b) in enumerate(params):
        h = h @ w + b
        if idx != n - 1:
            h = 0.909 * h * jax.nn.sigmoid(h)
        elif tanh:
            h = jnp.tanh(h)
    return h


if __name__ == "__main__":
    # Hyperparameters consistent with the sde_gan MLP usage.
    in_size, out_size, mlp_size, num_layers, use_tanh = 8, 4, 32, 3, True

    key = jax.random.PRNGKey(0)
    kp, kx, kx2 = jax.random.split(key, 3)
    params = init_mlp_params(kp, in_size, out_size, mlp_size, num_layers)

    # --- correctness: small batch, f32 weights, tight tolerance ---
    batch = 8
    x = jax.random.normal(kx, (batch, in_size), jnp.float32)
    packed_f32 = prepare_padded_params(params, param_dtype=jnp.float32)
    out = mlp_forward(packed_f32, x, tanh=use_tanh, tile_b=128)
    out = jax.block_until_ready(out)
    ref = mlp_reference(params, x, use_tanh)
    assert out.shape == (batch, out_size)
    assert jnp.allclose(out, ref, atol=1e-5, rtol=1e-5), (
        "Pallas f32 output mismatch vs reference")

    # --- batched path: multi-tile grid, bf16 weights, f32 accumulation ---
    big_batch = 256
    xb = jax.random.normal(kx2, (big_batch, in_size), jnp.float32)
    packed_bf16 = prepare_padded_params(params, param_dtype=jnp.bfloat16)
    outb = mlp_forward(packed_bf16, xb, tanh=use_tanh, tile_b=128)
    outb = jax.block_until_ready(outb)
    refb = mlp_reference(params, xb, use_tanh)
    assert outb.shape == (big_batch, out_size)
    assert jnp.allclose(outb, refb, atol=5e-2, rtol=5e-2), (
        "Pallas bf16 output mismatch vs reference")

    print("KERNEL_OK")
</pallas_src>

<mosaic_0001>
module attributes {stable_mosaic.version = 11 : i64} {
  func.func @_mlp_fused_kernel(%arg0: i32, %arg1: memref<8x8xf32, #tpu.memory_space<vmem>>, %arg2: memref<8x128xf32, #tpu.memory_space<vmem>>, %arg3: memref<2x128x128xf32, #tpu.memory_space<vmem>>, %arg4: memref<3x1x128xf32, #tpu.memory_space<vmem>>, %arg5: memref<128x128xf32, #tpu.memory_space<vmem>>, %arg6: memref<1x128xf32, #tpu.memory_space<vmem>>, %arg7: memref<8x128xf32, #tpu.memory_space<vmem>>) attributes {dimension_semantics = [#tpu.dimension_semantics<parallel>], iteration_bounds = array<i64: 1>, scalar_prefetch = 0 : i64, scratch_operands = 0 : i64, tpu.core_type = #tpu.core_type<tc>, window_params = [{transform_indices = @transform_0, window_bounds = array<i64: 8, 8>}, {pipeline_mode = #tpu.pipeline_mode<synchronous>, transform_indices = @transform_1, window_bounds = array<i64: 8, 128>}, {pipeline_mode = #tpu.pipeline_mode<synchronous>, transform_indices = @transform_2, window_bounds = array<i64: 2, 128, 128>}, {pipeline_mode = #tpu.pipeline_mode<synchronous>, transform_indices = @transform_3, window_bounds = array<i64: 3, 1, 128>}, {pipeline_mode = #tpu.pipeline_mode<synchronous>, transform_indices = @transform_4, window_bounds = array<i64: 128, 128>}, {pipeline_mode = #tpu.pipeline_mode<synchronous>, transform_indices = @transform_5, window_bounds = array<i64: 1, 128>}, {transform_indices = @transform_6, window_bounds = array<i64: 8, 128>}]} {
    %c0 = arith.constant 0 : index
    %c0_0 = arith.constant 0 : index
    %0 = vector.load %arg1[%c0, %c0_0] : memref<8x8xf32, #tpu.memory_space<vmem>>, vector<8x8xf32>
    %c0_1 = arith.constant 0 : index
    %c0_2 = arith.constant 0 : index
    %1 = vector.load %arg2[%c0_1, %c0_2] : memref<8x128xf32, #tpu.memory_space<vmem>>, vector<8x128xf32>
    %cst = arith.constant dense<0.000000e+00> : vector<8x128xf32>
    %2 = tpu.matmul %0, %1, %cst {dimension_numbers = #tpu.dot_dimension_numbers<[1], [0], [0], [1], [0, 0, 1, 1], [], []>} : vector<8x8xf32>, vector<8x128xf32>, vector<8x128xf32> -> vector<8x128xf32>
    %c0_3 = arith.constant 0 : index
    %c0_4 = arith.constant 0 : index
    %c0_5 = arith.constant 0 : index
    %3 = vector.load %arg4[%c0_3, %c0_4, %c0_5] : memref<3x1x128xf32, #tpu.memory_space<vmem>>, vector<1x1x128xf32>
    %4 = vector.shape_cast %3 : vector<1x1x128xf32> to vector<1x128xf32>
    %5 = vector.broadcast %4 : vector<1x128xf32> to vector<8x128xf32>
    %6 = arith.addf %2, %5 : vector<8x128xf32>
    %cst_6 = arith.constant 5.000000e-01 : f32
    %7 = vector.broadcast %cst_6 : f32 to vector<8x128xf32>
    %8 = arith.mulf %7, %6 : vector<8x128xf32>
    %9 = math.tanh %8 : vector<8x128xf32>
    %cst_7 = arith.constant 5.000000e-01 : f32
    %10 = vector.broadcast %cst_7 : f32 to vector<8x128xf32>
    %11 = arith.mulf %10, %9 : vector<8x128xf32>
    %cst_8 = arith.constant 5.000000e-01 : f32
    %12 = vector.broadcast %cst_8 : f32 to vector<8x128xf32>
    %13 = arith.addf %12, %11 : vector<8x128xf32>
    %cst_9 = arith.constant 0.908999979 : f32
    %14 = vector.broadcast %cst_9 : f32 to vector<8x128xf32>
    %15 = arith.mulf %14, %13 : vector<8x128xf32>
    %16 = arith.mulf %6, %15 : vector<8x128xf32>
    %c0_10 = arith.constant 0 : index
    %c0_11 = arith.constant 0 : index
    %c0_12 = arith.constant 0 : index
    %17 = vector.load %arg3[%c0_10, %c0_11, %c0_12] : memref<2x128x128xf32, #tpu.memory_space<vmem>>, vector<1x128x128xf32>
    %18 = vector.shape_cast %17 : vector<1x128x128xf32> to vector<128x128xf32>
    %cst_13 = arith.constant dense<0.000000e+00> : vector<8x128xf32>
    %19 = tpu.matmul %16, %18, %cst_13 {dimension_numbers = #tpu.dot_dimension_numbers<[1], [0], [0], [1], [0, 0, 1, 1], [], []>} : vector<8x128xf32>, vector<128x128xf32>, vector<8x128xf32> -> vector<8x128xf32>
    %c1 = arith.constant 1 : index
    %c0_14 = arith.constant 0 : index
    %c0_15 = arith.constant 0 : index
    %20 = vector.load %arg4[%c1, %c0_14, %c0_15] : memref<3x1x128xf32, #tpu.memory_space<vmem>>, vector<1x1x128xf32>
    %21 = vector.shape_cast %20 : vector<1x1x128xf32> to vector<1x128xf32>
    %22 = vector.broadcast %21 : vector<1x128xf32> to vector<8x128xf32>
    %23 = arith.addf %19, %22 : vector<8x128xf32>
    %cst_16 = arith.constant 5.000000e-01 : f32
    %24 = vector.broadcast %cst_16 : f32 to vector<8x128xf32>
    %25 = arith.mulf %24, %23 : vector<8x128xf32>
    %26 = math.tanh %25 : vector<8x128xf32>
    %cst_17 = arith.constant 5.000000e-01 : f32
    %27 = vector.broadcast %cst_17 : f32 to vector<8x128xf32>
    %28 = arith.mulf %27, %26 : vector<8x128xf32>
    %cst_18 = arith.constant 5.000000e-01 : f32
    %29 = vector.broadcast %cst_18 : f32 to vector<8x128xf32>
    %30 = arith.addf %29, %28 : vector<8x128xf32>
    %cst_19 = arith.constant 0.908999979 : f32
    %31 = vector.broadcast %cst_19 : f32 to vector<8x128xf32>
    %32 = arith.mulf %31, %30 : vector<8x128xf32>
    %33 = arith.mulf %23, %32 : vector<8x128xf32>
    %c1_20 = arith.constant 1 : index
    %c0_21 = arith.constant 0 : index
    %c0_22 = arith.constant 0 : index
    %34 = vector.load %arg3[%c1_20, %c0_21, %c0_22] : memref<2x128x128xf32, #tpu.memory_space<vmem>>, vector<1x128x128xf32>
    %35 = vector.shape_cast %34 : vector<1x128x128xf32> to vector<128x128xf32>
    %cst_23 = arith.constant dense<0.000000e+00> : vector<8x128xf32>
    %36 = tpu.matmul %33, %35, %cst_23 {dimension_numbers = #tpu.dot_dimension_numbers<[1], [0], [0], [1], [0, 0, 1, 1], [], []>} : vector<8x128xf32>, vector<128x128xf32>, vector<8x128xf32> -> vector<8x128xf32>
    %c2 = arith.constant 2 : index
    %c0_24 = arith.constant 0 : index
    %c0_25 = arith.constant 0 : index
    %37 = vector.load %arg4[%c2, %c0_24, %c0_25] : memref<3x1x128xf32, #tpu.memory_space<vmem>>, vector<1x1x128xf32>
    %38 = vector.shape_cast %37 : vector<1x1x128xf32> to vector<1x128xf32>
    %39 = vector.broadcast %38 : vector<1x128xf32> to vector<8x128xf32>
    %40 = arith.addf %36, %39 : vector<8x128xf32>
    %cst_26 = arith.constant 5.000000e-01 : f32
    %41 = vector.broadcast %cst_26 : f32 to vector<8x128xf32>
    %42 = arith.mulf %41, %40 : vector<8x128xf32>
    %43 = math.tanh %42 : vector<8x128xf32>
    %cst_27 = arith.constant 5.000000e-01 : f32
    %44 = vector.broadcast %cst_27 : f32 to vector<8x128xf32>
    %45 = arith.mulf %44, %43 : vector<8x128xf32>
    %cst_28 = arith.constant 5.000000e-01 : f32
    %46 = vector.broadcast %cst_28 : f32 to vector<8x128xf32>
    %47 = arith.addf %46, %45 : vector<8x128xf32>
    %cst_29 = arith.constant 0.908999979 : f32
    %48 = vector.broadcast %cst_29 : f32 to vector<8x128xf32>
    %49 = arith.mulf %48, %47 : vector<8x128xf32>
    %50 = arith.mulf %40, %49 : vector<8x128xf32>
    %c0_30 = arith.constant 0 : index
    %c0_31 = arith.constant 0 : index
    %51 = vector.load %arg5[%c0_30, %c0_31] : memref<128x128xf32, #tpu.memory_space<vmem>>, vector<128x128xf32>
    %cst_32 = arith.constant dense<0.000000e+00> : vector<8x128xf32>
    %52 = tpu.matmul %50, %51, %cst_32 {dimension_numbers = #tpu.dot_dimension_numbers<[1], [0], [0], [1], [0, 0, 1, 1], [], []>} : vector<8x128xf32>, vector<128x128xf32>, vector<8x128xf32> -> vector<8x128xf32>
    %c0_33 = arith.constant 0 : index
    %c0_34 = arith.constant 0 : index
    %53 = vector.load %arg6[%c0_33, %c0_34] : memref<1x128xf32, #tpu.memory_space<vmem>>, vector<1x128xf32>
    %54 = vector.broadcast %53 : vector<1x128xf32> to vector<8x128xf32>
    %55 = arith.addf %52, %54 : vector<8x128xf32>
    %56 = math.tanh %55 : vector<8x128xf32>
    %c0_35 = arith.constant 0 : index
    %c0_36 = arith.constant 0 : index
    %57 = vector.load %arg7[%c0_35, %c0_36] : memref<8x128xf32, #tpu.memory_space<vmem>>, vector<8x128xf32>
    tpu.vector_store %arg7[%c0_35, %c0_36], %56 {strides = array<i32>} : memref<8x128xf32, #tpu.memory_space<vmem>>, vector<8x128xf32>,
    return
  }
  func.func @transform_0(%arg0: i32) -> (i32, i32) {
    %c0_i32 = arith.constant 0 : i32
    %c0_i32_0 = arith.constant 0 : i32
    return %arg0, %c0_i32 : i32, i32
  }
  func.func @transform_1(%arg0: i32) -> (i32, i32) {
    %c0_i32 = arith.constant 0 : i32
    %c0_i32_0 = arith.constant 0 : i32
    %c0_i32_1 = arith.constant 0 : i32
    return %c0_i32, %c0_i32_0 : i32, i32
  }
  func.func @transform_2(%arg0: i32) -> (i32, i32, i32) {
    %c0_i32 = arith.constant 0 : i32
    %c0_i32_0 = arith.constant 0 : i32
    %c0_i32_1 = arith.constant 0 : i32
    %c0_i32_2 = arith.constant 0 : i32
    return %c0_i32, %c0_i32_0, %c0_i32_1 : i32, i32, i32
  }
  func.func @transform_3(%arg0: i32) -> (i32, i32, i32) {
    %c0_i32 = arith.constant 0 : i32
    %c0_i32_0 = arith.constant 0 : i32
    %c0_i32_1 = arith.constant 0 : i32
    %c0_i32_2 = arith.constant 0 : i32
    return %c0_i32, %c0_i32_0, %c0_i32_1 : i32, i32, i32
  }
  func.func @transform_4(%arg0: i32) -> (i32, i32) {
    %c0_i32 = arith.constant 0 : i32
    %c0_i32_0 = arith.constant 0 : i32
    %c0_i32_1 = arith.constant 0 : i32
    return %c0_i32, %c0_i32_0 : i32, i32
  }
  func.func @transform_5(%arg0: i32) -> (i32, i32) {
    %c0_i32 = arith.constant 0 : i32
    %c0_i32_0 = arith.constant 0 : i32
    %c0_i32_1 = arith.constant 0 : i32
    return %c0_i32, %c0_i32_0 : i32, i32
  }
  func.func @transform_6(%arg0: i32) -> (i32, i32) {
    %c0_i32 = arith.constant 0 : i32
    %c0_i32_0 = arith.constant 0 : i32
    return %arg0, %c0_i32 : i32, i32
  }
}

</mosaic_0001>

<llo_original>
// kernel: tpu_custom_call.1
$region0: #{tpu_custom_call.1}
  #allocation0 [shape = 'u32[]', space=smem, size = 0x4, offset = 0x4, fixed_abs, tag = 'smem constant byte address 0x4 - core index']
  #allocation1 [shape = 'u32[144,128]{1,0:T(1,128)}', space=vmem, size = 0x12000, scoped, tag = 'internal scratch']
  %s0 = inlined_call_operand.hbm [shape: f32[8,8], index: 0, kind: input, shape index: {}]
  %s1 = inlined_call_operand.hbm [shape: f32[8,128], index: 1, kind: input, shape index: {}]
  %s2 = inlined_call_operand.hbm [shape: f32[2,128,128], index: 2, kind: input, shape index: {}]
  %s3 = inlined_call_operand.vmem [shape: f32[3,1,128], index: 3, kind: input, shape index: {}]
  %s4 = inlined_call_operand.hbm [shape: f32[128,128], index: 4, kind: input, shape index: {}]
  %s5 = inlined_call_operand.vmem [shape: f32[1,128], index: 5, kind: input, shape index: {}]
  %s6 = inlined_call_operand.hbm [shape: f32[8,128], index: 6, kind: output, shape index: {}]
  %s7 = sld [smem:[#allocation0]]
  $region50: #{tpu_custom_call.1} parent=0
    _
  %s9 = ssub.s32 1, %s7
  %s10 = scalar_select 0, %s9, %s7
  $region1: #{tpu_custom_call.1} parent=0
    #allocation2 [shape = 'u8[4096]{0}', space=vmem, size = 0x1000, scoped, tag = 'input window, operand 0, single buffered']
    #allocation3 [shape = 's32[1]{0}', space=sflag, size = 0x4, scoped, tag = 'scoped memory for tpu_custom_call.1']
    #allocation4 [shape = 's32[1]{0}', space=sflag, size = 0x4, scoped, tag = 'scoped memory for tpu_custom_call.1']
    #allocation5 [shape = 'u8[4096]{0}', space=vmem, size = 0x1000, scoped, tag = 'input window, operand 1, single buffered']
    #allocation6 [shape = 's32[1]{0}', space=sflag, size = 0x4, scoped, tag = 'scoped memory for tpu_custom_call.1']
    #allocation7 [shape = 'u8[131072]{0}', space=vmem, size = 0x20000, scoped, tag = 'input window, operand 2, single buffered']
    #allocation8 [shape = 'u8[65536]{0}', space=vmem, size = 0x10000, scoped, tag = 'input window, operand 4, single buffered']
    #allocation9 [shape = 's32[1]{0}', space=sflag, size = 0x4, scoped, tag = 'scoped memory for tpu_custom_call.1']
    #allocation10 [shape = 'u8[4096]{0}', space=vmem, size = 0x1000, scoped, tag = 'output window, operand 0, single buffered']
    %11 = vsyncpa [#allocation3], 0
    %12 = vsyncpa [#allocation6], 0
    %13 = vsyncpa [#allocation9], 0
    %14 = vsyncpa [#allocation4], 0
    // Predicated region
    $region2: #{tpu_custom_call.1} parent=1 // pred_check
      _
    $region3: #{tpu_custom_call.1} parent=1 // pred_check_branch
      %16 = sbr.rel (0) target = $region5
    $region4: #{tpu_custom_call.1} parent=1 // pred_region
      %s18 = ssub.s32 128, 128
      %19 = vsyncadd [#allocation3], %s18
      %s21 = sshll.u32 [#allocation2], 4
      %s22 = int_to_ptr.vmem [resolvable:$true] %s21
      %24 = dma.hbm_to_vmem [thread:$0]  %s0, 128, %s22, [#allocation3]
    $region5: #{tpu_custom_call.1} parent=1 // pred_fallthru
      _
    // Predicated region
    $region6: #{tpu_custom_call.1} parent=1 // pred_check
      _
    $region7: #{tpu_custom_call.1} parent=1 // pred_check_branch
      %26 = sbr.rel (0) target = $region9
    $region8: #{tpu_custom_call.1} parent=1 // pred_region
      %s28 = ssub.s32 128, 128
      %29 = vsyncadd [#allocation6], %s28
      %s31 = sshll.u32 [#allocation5], 4
      %s32 = int_to_ptr.vmem [resolvable:$true] %s31
      %34 = dma.hbm_to_vmem [thread:$0]  %s1, 128, %s32, [#allocation6]
    $region9: #{tpu_custom_call.1} parent=1 // pred_fallthru
      _
    // Predicated region
    $region10: #{tpu_custom_call.1} parent=1 // pred_check
      _
    $region11: #{tpu_custom_call.1} parent=1 // pred_check_branch
      %36 = sbr.rel (0) target = $region13
    $region12: #{tpu_custom_call.1} parent=1 // pred_region
      %s38 = ssub.s32 4096, 4096
      %39 = vsyncadd [#allocation6], %s38
      %s40 = sshll.u32 [#allocation7], 4
      %s41 = int_to_ptr.vmem [resolvable:$true] %s40
      %46 = dma.hbm_to_vmem [thread:$0]  %s2, 4096, %s41, [#allocation6], 128, 128, 8
    $region13: #{tpu_custom_call.1} parent=1 // pred_fallthru
      _
    // Predicated region
    $region14: #{tpu_custom_call.1} parent=1 // pred_check
      _
    $region15: #{tpu_custom_call.1} parent=1 // pred_check_branch
      %48 = sbr.rel (0) target = $region17
    $region16: #{tpu_custom_call.1} parent=1 // pred_region
      _
    $region17: #{tpu_custom_call.1} parent=1 // pred_fallthru
      _
    // Predicated region
    $region18: #{tpu_custom_call.1} parent=1 // pred_check
      _
    $region19: #{tpu_custom_call.1} parent=1 // pred_check_branch
      %50 = sbr.rel (0) target = $region21
    $region20: #{tpu_custom_call.1} parent=1 // pred_region
      %s52 = ssub.s32 2048, 2048
      %53 = vsyncadd [#allocation9], %s52
      %s54 = sshll.u32 [#allocation8], 4
      %s55 = int_to_ptr.vmem [resolvable:$true] %s54
      %60 = dma.hbm_to_vmem [thread:$0]  %s4, 2048, %s55, [#allocation9], 128, 128, 8
    $region21: #{tpu_custom_call.1} parent=1 // pred_fallthru
      _
    // Predicated region
    $region22: #{tpu_custom_call.1} parent=1 // pred_check
      _
    $region23: #{tpu_custom_call.1} parent=1 // pred_check_branch
      %62 = sbr.rel (0) target = $region25
    $region24: #{tpu_custom_call.1} parent=1 // pred_region
      _
    $region25: #{tpu_custom_call.1} parent=1 // pred_fallthru
      _
    // Predicated region
    $region26: #{tpu_custom_call.1} parent=1 // pred_check
      _
    $region27: #{tpu_custom_call.1} parent=1 // pred_check_branch
      %64 = sbr.rel (0) target = $region29
    $region28: #{tpu_custom_call.1} parent=1 // pred_region
      %65 = dma.done [#allocation3], 128
    $region29: #{tpu_custom_call.1} parent=1 // pred_fallthru
      _
    // Predicated region
    $region30: #{tpu_custom_call.1} parent=1 // pred_check
      _
    $region31: #{tpu_custom_call.1} parent=1 // pred_check_branch
      %67 = sbr.rel (0) target = $region33
    $region32: #{tpu_custom_call.1} parent=1 // pred_region
      %68 = dma.done [#allocation6], 128
    $region33: #{tpu_custom_call.1} parent=1 // pred_fallthru
      _
    // Predicated region
    $region34: #{tpu_custom_call.1} parent=1 // pred_check
      _
    $region35: #{tpu_custom_call.1} parent=1 // pred_check_branch
      %70 = sbr.rel (0) target = $region37
    $region36: #{tpu_custom_call.1} parent=1 // pred_region
      %71 = dma.done [#allocation6], 4096
    $region37: #{tpu_custom_call.1} parent=1 // pred_fallthru
      _
    // Predicated region
    $region38: #{tpu_custom_call.1} parent=1 // pred_check
      _
    $region39: #{tpu_custom_call.1} parent=1 // pred_check_branch
      %73 = sbr.rel (0) target = $region41
    $region40: #{tpu_custom_call.1} parent=1 // pred_region
      %74 = dma.done [#allocation9], 2048
    $region41: #{tpu_custom_call.1} parent=1 // pred_fallthru
      _
    %v75 = vld [vmem:[#allocation2] sm:$0xff]
    %v76 = vld [vmem:[#allocation5] sm:$0xff]
    %v77 = vld [vmem:[%s3] sm:$0x1]
    %v79 = vlaneseq
    %v80 = vshrl.u32 %v79, 7
    %v81 = vsub.s32 0, %v80
    %v82 = vrot.slane %v77, %v81
    %vm84 = vcmask 64512
    %v86 = vsel %vm84, %v75, 0
    %88 = vmatprep.subr.mxu0 0.0
    %89 = vmatpush1.msra.mxu0 %v76
    %90 = vmatprep.subr.mxu0 0.0
    %91 = vmatpush1.msra.mxu0 0.0
    %92 = vmatprep.subr.mxu0 0.0
    %93 = vmatpush1.msra.mxu0 0.0
    %94 = vmatprep.subr.mxu0 0.0
    %95 = vmatpush1.msra.mxu0 0.0
    %96 = vmatprep.subr.mxu0 0.0
    %97 = vmatpush1.msra.mxu0 0.0
    %98 = vmatprep.subr.mxu0 0.0
    %99 = vmatpush1.msra.mxu0 0.0
    %100 = vmatprep.subr.mxu0 0.0
    %101 = vmatpush1.msra.mxu0 0.0
    %102 = vmatprep.subr.mxu0 0.0
    %103 = vmatpush1.msra.mxu0 0.0
    %104 = vmatprep.subr.mxu0 0.0
    %105 = vmatpush1.msra.mxu0 0.0
    %106 = vmatprep.subr.mxu0 0.0
    %107 = vmatpush1.msra.mxu0 0.0
    %108 = vmatprep.subr.mxu0 0.0
    %109 = vmatpush1.msra.mxu0 0.0
    %110 = vmatprep.subr.mxu0 0.0
    %111 = vmatpush1.msra.mxu0 0.0
    %112 = vmatprep.subr.mxu0 0.0
    %113 = vmatpush1.msra.mxu0 0.0
    %114 = vmatprep.subr.mxu0 0.0
    %115 = vmatpush1.msra.mxu0 0.0
    %116 = vmatprep.subr.mxu0 0.0
    %117 = vmatpush1.msra.mxu0 0.0
    %118 = vmatprep.subr.mxu0 0.0
    %119 = vmatpush1.msra.mxu0 0.0
    %120 = vmatprep.subr.mxu0 0.0
    %121 = vmatpush1.msra.mxu0 0.0
    %122 = vmatprep.subr.mxu0 0.0
    %123 = vmatpush1.msra.mxu0 0.0
    %124 = vmatprep.subr.mxu0 0.0
    %125 = vmatpush1.msra.mxu0 0.0
    %126 = vmatprep.subr.mxu0 0.0
    %127 = vmatpush1.msra.mxu0 0.0
    %128 = vmatprep.subr.mxu0 0.0
    %129 = vmatpush1.msra.mxu0 0.0
    %130 = vmatprep.subr.mxu0 0.0
    %131 = vmatpush1.msra.mxu0 0.0
    %132 = vmatprep.subr.mxu0 0.0
    %133 = vmatpush1.msra.mxu0 0.0
    %134 = vmatprep.subr.mxu0 0.0
    %135 = vmatpush1.msra.mxu0 0.0
    %136 = vmatprep.subr.mxu0 0.0
    %137 = vmatpush1.msra.mxu0 0.0
    %138 = vmatprep.subr.mxu0 0.0
    %139 = vmatpush1.msra.mxu0 0.0
    %140 = vmatprep.subr.mxu0 0.0
    %141 = vmatpush1.msra.mxu0 0.0
    %142 = vmatprep.subr.mxu0 0.0
    %143 = vmatpush1.msra.mxu0 0.0
    %144 = vmatprep.subr.mxu0 0.0
    %145 = vmatpush1.msra.mxu0 0.0
    %146 = vmatprep.subr.mxu0 0.0
    %147 = vmatpush1.msra.mxu0 0.0
    %148 = vmatprep.subr.mxu0 0.0
    %149 = vmatpush1.msra.mxu0 0.0
    %150 = vmatprep.subr.mxu0 0.0
    %151 = vmatpush1.msra.mxu0 0.0
    %152 = vmatprep.mubr.f32.mxu0 0.0
    %153 = vmatmul.mubr.f32.gmra.mrb[0].mxu0 %v86
    %v154 = vpop.f32.mrb[0].mxu0
    %v155 = vadd.f32 %v82, %v154
    %v156 = vpop.f32.mrb[0].mxu0
    %157 = vdwg.mxu0
    %v158 = vmul.f32 %v155, 0.5
    %v159 = vtanh.pop %v158
    %v160 = vmul.f32 %v159, 0.5
    %v161 = vadd.f32 %v160, 0.5
    %v162 = vmul.f32 %v161, 0.909
    %v163 = vmul.f32 %v155, %v162
    %v164 = vld [vmem:[#allocation7] sm:$0xff]
    %v165 = vld [vmem:[#allocation7 + $0x8] sm:$0xff]
    %v166 = vld [vmem:[#allocation7 + $0x10] sm:$0xff]
    %v167 = vld [vmem:[#allocation7 + $0x18] sm:$0xff]
    %v168 = vld [vmem:[#allocation7 + $0x20] sm:$0xff]
    %v169 = vld [vmem:[#allocation7 + $0x28] sm:$0xff]
    %v170 = vld [vmem:[#allocation7 + $0x30] sm:$0xff]
    %v171 = vld [vmem:[#allocation7 + $0x38] sm:$0xff]
    %v172 = vld [vmem:[#allocation7 + $0x40] sm:$0xff]
    %v173 = vld [vmem:[#allocation7 + $0x48] sm:$0xff]
    %v174 = vld [vmem:[#allocation7 + $0x50] sm:$0xff]
    %v175 = vld [vmem:[#allocation7 + $0x58] sm:$0xff]
    %v176 = vld [vmem:[#allocation7 + $0x60] sm:$0xff]
    %v177 = vld [vmem:[#allocation7 + $0x68] sm:$0xff]
    %v178 = vld [vmem:[#allocation7 + $0x70] sm:$0xff]
    %v179 = vld [vmem:[#allocation7 + $0x78] sm:$0xff]
    %s180 = scalar_lea.vmem %s3, 1
    %v181 = vld [vmem:[%s180] sm:$0x1]
    %v183 = vlaneseq
    %v184 = vshrl.u32 %v183, 7
    %v185 = vsub.s32 0, %v184
    %v186 = vrot.slane %v181, %v185
    %188 = vmatprep.subr.mxu0 0.0
    %189 = vmatpush1.msra.mxu0 %v164
    %190 = vmatprep.subr.mxu0 0.0
    %191 = vmatpush1.msra.mxu0 %v165
    %192 = vmatprep.subr.mxu0 0.0
    %193 = vmatpush1.msra.mxu0 %v166
    %194 = vmatprep.subr.mxu0 0.0
    %195 = vmatpush1.msra.mxu0 %v167
    %196 = vmatprep.subr.mxu0 0.0
    %197 = vmatpush1.msra.mxu0 %v168
    %198 = vmatprep.subr.mxu0 0.0
    %199 = vmatpush1.msra.mxu0 %v169
    %200 = vmatprep.subr.mxu0 0.0
    %201 = vmatpush1.msra.mxu0 %v170
    %202 = vmatprep.subr.mxu0 0.0
    %203 = vmatpush1.msra.mxu0 %v171
    %204 = vmatprep.subr.mxu0 0.0
    %205 = vmatpush1.msra.mxu0 %v172
    %206 = vmatprep.subr.mxu0 0.0
    %207 = vmatpush1.msra.mxu0 %v173
    %208 = vmatprep.subr.mxu0 0.0
    %209 = vmatpush1.msra.mxu0 %v174
    %210 = vmatprep.subr.mxu0 0.0
    %211 = vmatpush1.msra.mxu0 %v175
    %212 = vmatprep.subr.mxu0 0.0
    %213 = vmatpush1.msra.mxu0 %v176
    %214 = vmatprep.subr.mxu0 0.0
    %215 = vmatpush1.msra.mxu0 %v177
    %216 = vmatprep.subr.mxu0 0.0
    %217 = vmatpush1.msra.mxu0 %v178
    %218 = vmatprep.subr.mxu0 0.0
    %219 = vmatpush1.msra.mxu0 %v179
    %220 = vmatprep.subr.mxu0 0.0
    %221 = vmatpush1.msra.mxu0 0.0
    %222 = vmatprep.subr.mxu0 0.0
    %223 = vmatpush1.msra.mxu0 0.0
    %224 = vmatprep.subr.mxu0 0.0
    %225 = vmatpush1.msra.mxu0 0.0
    %226 = vmatprep.subr.mxu0 0.0
    %227 = vmatpush1.msra.mxu0 0.0
    %228 = vmatprep.subr.mxu0 0.0
    %229 = vmatpush1.msra.mxu0 0.0
    %230 = vmatprep.subr.mxu0 0.0
    %231 = vmatpush1.msra.mxu0 0.0
    %232 = vmatprep.subr.mxu0 0.0
    %233 = vmatpush1.msra.mxu0 0.0
    %234 = vmatprep.subr.mxu0 0.0
    %235 = vmatpush1.msra.mxu0 0.0
    %236 = vmatprep.subr.mxu0 0.0
    %237 = vmatpush1.msra.mxu0 0.0
    %238 = vmatprep.subr.mxu0 0.0
    %239 = vmatpush1.msra.mxu0 0.0
    %240 = vmatprep.subr.mxu0 0.0
    %241 = vmatpush1.msra.mxu0 0.0
    %242 = vmatprep.subr.mxu0 0.0
    %243 = vmatpush1.msra.mxu0 0.0
    %244 = vmatprep.subr.mxu0 0.0
    %245 = vmatpush1.msra.mxu0 0.0
    %246 = vmatprep.subr.mxu0 0.0
    %247 = vmatpush1.msra.mxu0 0.0
    %248 = vmatprep.subr.mxu0 0.0
    %249 = vmatpush1.msra.mxu0 0.0
    %250 = vmatprep.subr.mxu0 0.0
    %251 = vmatpush1.msra.mxu0 0.0
    %252 = vmatprep.mubr.f32.mxu0 0.0
    %253 = vmatmul.mubr.f32.gmra.mrb[0].mxu0 %v163
    %v254 = vpop.f32.mrb[0].mxu0
    %v255 = vadd.f32 %v186, %v254
    %v256 = vpop.f32.mrb[0].mxu0
    %257 = vdwg.mxu0
    %v258 = vmul.f32 %v255, 0.5
    %v259 = vtanh.pop %v258
    %v260 = vmul.f32 %v259, 0.5
    %v261 = vadd.f32 %v260, 0.5
    %v262 = vmul.f32 %v261, 0.909
    %v263 = vmul.f32 %v255, %v262
    %s264 = scalar_lea.vmem [#allocation7], 128
    %v265 = vld [vmem:[%s264] sm:$0xff]
    %v266 = vld [vmem:[%s264 + $0x8] sm:$0xff]
    %v267 = vld [vmem:[%s264 + $0x10] sm:$0xff]
    %v268 = vld [vmem:[%s264 + $0x18] sm:$0xff]
    %v269 = vld [vmem:[%s264 + $0x20] sm:$0xff]
    %v270 = vld [vmem:[%s264 + $0x28] sm:$0xff]
    %v271 = vld [vmem:[%s264 + $0x30] sm:$0xff]
    %v272 = vld [vmem:[%s264 + $0x38] sm:$0xff]
    %v273 = vld [vmem:[%s264 + $0x40] sm:$0xff]
    %v274 = vld [vmem:[%s264 + $0x48] sm:$0xff]
    %v275 = vld [vmem:[%s264 + $0x50] sm:$0xff]
    %v276 = vld [vmem:[%s264 + $0x58] sm:$0xff]
    %v277 = vld [vmem:[%s264 + $0x60] sm:$0xff]
    %v278 = vld [vmem:[%s264 + $0x68] sm:$0xff]
    %v279 = vld [vmem:[%s264 + $0x70] sm:$0xff]
    %v280 = vld [vmem:[%s264 + $0x78] sm:$0xff]
    %s281 = scalar_lea.vmem %s3, 2
    %v282 = vld [vmem:[%s281] sm:$0x1]
    %v284 = vlaneseq
    %v285 = vshrl.u32 %v284, 7
    %v286 = vsub.s32 0, %v285
    %v287 = vrot.slane %v282, %v286
    %289 = vmatprep.subr.mxu0 0.0
    %290 = vmatpush1.msra.mxu0 %v265
    %291 = vmatprep.subr.mxu0 0.0
    %292 = vmatpush1.msra.mxu0 %v266
    %293 = vmatprep.subr.mxu0 0.0
    %294 = vmatpush1.msra.mxu0 %v267
    %295 = vmatprep.subr.mxu0 0.0
    %296 = vmatpush1.msra.mxu0 %v268
    %297 = vmatprep.subr.mxu0 0.0
    %298 = vmatpush1.msra.mxu0 %v269
    %299 = vmatprep.subr.mxu0 0.0
    %300 = vmatpush1.msra.mxu0 %v270
    %301 = vmatprep.subr.mxu0 0.0
    %302 = vmatpush1.msra.mxu0 %v271
    %303 = vmatprep.subr.mxu0 0.0
    %304 = vmatpush1.msra.mxu0 %v272
    %305 = vmatprep.subr.mxu0 0.0
    %306 = vmatpush1.msra.mxu0 %v273
    %307 = vmatprep.subr.mxu0 0.0
    %308 = vmatpush1.msra.mxu0 %v274
    %309 = vmatprep.subr.mxu0 0.0
    %310 = vmatpush1.msra.mxu0 %v275
    %311 = vmatprep.subr.mxu0 0.0
    %312 = vmatpush1.msra.mxu0 %v276
    %313 = vmatprep.subr.mxu0 0.0
    %314 = vmatpush1.msra.mxu0 %v277
    %315 = vmatprep.subr.mxu0 0.0
    %316 = vmatpush1.msra.mxu0 %v278
    %317 = vmatprep.subr.mxu0 0.0
    %318 = vmatpush1.msra.mxu0 %v279
    %319 = vmatprep.subr.mxu0 0.0
    %320 = vmatpush1.msra.mxu0 %v280
    %321 = vmatprep.subr.mxu0 0.0
    %322 = vmatpush1.msra.mxu0 0.0
    %323 = vmatprep.subr.mxu0 0.0
    %324 = vmatpush1.msra.mxu0 0.0
    %325 = vmatprep.subr.mxu0 0.0
    %326 = vmatpush1.msra.mxu0 0.0
    %327 = vmatprep.subr.mxu0 0.0
    %328 = vmatpush1.msra.mxu0 0.0
    %329 = vmatprep.subr.mxu0 0.0
    %330 = vmatpush1.msra.mxu0 0.0
    %331 = vmatprep.subr.mxu0 0.0
    %332 = vmatpush1.msra.mxu0 0.0
    %333 = vmatprep.subr.mxu0 0.0
    %334 = vmatpush1.msra.mxu0 0.0
    %335 = vmatprep.subr.mxu0 0.0
    %336 = vmatpush1.msra.mxu0 0.0
    %337 = vmatprep.subr.mxu0 0.0
    %338 = vmatpush1.msra.mxu0 0.0
    %339 = vmatprep.subr.mxu0 0.0
    %340 = vmatpush1.msra.mxu0 0.0
    %341 = vmatprep.subr.mxu0 0.0
    %342 = vmatpush1.msra.mxu0 0.0
    %343 = vmatprep.subr.mxu0 0.0
    %344 = vmatpush1.msra.mxu0 0.0
    %345 = vmatprep.subr.mxu0 0.0
    %346 = vmatpush1.msra.mxu0 0.0
    %347 = vmatprep.subr.mxu0 0.0
    %348 = vmatpush1.msra.mxu0 0.0
    %349 = vmatprep.subr.mxu0 0.0
    %350 = vmatpush1.msra.mxu0 0.0
    %351 = vmatprep.subr.mxu0 0.0
    %352 = vmatpush1.msra.mxu0 0.0
    %353 = vmatprep.mubr.f32.mxu0 0.0
    %354 = vmatmul.mubr.f32.gmra.mrb[0].mxu0 %v263
    %v355 = vpop.f32.mrb[0].mxu0
    %v356 = vadd.f32 %v287, %v355
    %v357 = vpop.f32.mrb[0].mxu0
    %358 = vdwg.mxu0
    %v359 = vmul.f32 %v356, 0.5
    %v360 = vtanh.pop %v359
    %v361 = vmul.f32 %v360, 0.5
    %v362 = vadd.f32 %v361, 0.5
    %v363 = vmul.f32 %v362, 0.909
    %v364 = vmul.f32 %v356, %v363
    %v365 = vld [vmem:[#allocation8] sm:$0xff]
    %v366 = vld [vmem:[#allocation8 + $0x8] sm:$0xff]
    %v367 = vld [vmem:[#allocation8 + $0x10] sm:$0xff]
    %v368 = vld [vmem:[#allocation8 + $0x18] sm:$0xff]
    %v369 = vld [vmem:[#allocation8 + $0x20] sm:$0xff]
    %v370 = vld [vmem:[#allocation8 + $0x28] sm:$0xff]
    %v371 = vld [vmem:[#allocation8 + $0x30] sm:$0xff]
    %v372 = vld [vmem:[#allocation8 + $0x38] sm:$0xff]
    %v373 = vld [vmem:[#allocation8 + $0x40] sm:$0xff]
    %v374 = vld [vmem:[#allocation8 + $0x48] sm:$0xff]
    %v375 = vld [vmem:[#allocation8 + $0x50] sm:$0xff]
    %v376 = vld [vmem:[#allocation8 + $0x58] sm:$0xff]
    %v377 = vld [vmem:[#allocation8 + $0x60] sm:$0xff]
    %v378 = vld [vmem:[#allocation8 + $0x68] sm:$0xff]
    %v379 = vld [vmem:[#allocation8 + $0x70] sm:$0xff]
    %v380 = vld [vmem:[#allocation8 + $0x78] sm:$0xff]
    %v381 = vld [vmem:[%s5] sm:$0x1]
    %v383 = vlaneseq
    %v384 = vshrl.u32 %v383, 7
    %v385 = vsub.s32 0, %v384
    %v386 = vrot.slane %v381, %v385
    %388 = vmatprep.subr.mxu0 0.0
    %389 = vmatpush1.msra.mxu0 %v365
    %390 = vmatprep.subr.mxu0 0.0
    %391 = vmatpush1.msra.mxu0 %v366
    %392 = vmatprep.subr.mxu0 0.0
    %393 = vmatpush1.msra.mxu0 %v367
    %394 = vmatprep.subr.mxu0 0.0
    %395 = vmatpush1.msra.mxu0 %v368
    %396 = vmatprep.subr.mxu0 0.0
    %397 = vmatpush1.msra.mxu0 %v369
    %398 = vmatprep.subr.mxu0 0.0
    %399 = vmatpush1.msra.mxu0 %v370
    %400 = vmatprep.subr.mxu0 0.0
    %401 = vmatpush1.msra.mxu0 %v371
    %402 = vmatprep.subr.mxu0 0.0
    %403 = vmatpush1.msra.mxu0 %v372
    %404 = vmatprep.subr.mxu0 0.0
    %405 = vmatpush1.msra.mxu0 %v373
    %406 = vmatprep.subr.mxu0 0.0
    %407 = vmatpush1.msra.mxu0 %v374
    %408 = vmatprep.subr.mxu0 0.0
    %409 = vmatpush1.msra.mxu0 %v375
    %410 = vmatprep.subr.mxu0 0.0
    %411 = vmatpush1.msra.mxu0 %v376
    %412 = vmatprep.subr.mxu0 0.0
    %413 = vmatpush1.msra.mxu0 %v377
    %414 = vmatprep.subr.mxu0 0.0
    %415 = vmatpush1.msra.mxu0 %v378
    %416 = vmatprep.subr.mxu0 0.0
    %417 = vmatpush1.msra.mxu0 %v379
    %418 = vmatprep.subr.mxu0 0.0
    %419 = vmatpush1.msra.mxu0 %v380
    %420 = vmatprep.subr.mxu0 0.0
    %421 = vmatpush1.msra.mxu0 0.0
    %422 = vmatprep.subr.mxu0 0.0
    %423 = vmatpush1.msra.mxu0 0.0
    %424 = vmatprep.subr.mxu0 0.0
    %425 = vmatpush1.msra.mxu0 0.0
    %426 = vmatprep.subr.mxu0 0.0
    %427 = vmatpush1.msra.mxu0 0.0
    %428 = vmatprep.subr.mxu0 0.0
    %429 = vmatpush1.msra.mxu0 0.0
    %430 = vmatprep.subr.mxu0 0.0
    %431 = vmatpush1.msra.mxu0 0.0
    %432 = vmatprep.subr.mxu0 0.0
    %433 = vmatpush1.msra.mxu0 0.0
    %434 = vmatprep.subr.mxu0 0.0
    %435 = vmatpush1.msra.mxu0 0.0
    %436 = vmatprep.subr.mxu0 0.0
    %437 = vmatpush1.msra.mxu0 0.0
    %438 = vmatprep.subr.mxu0 0.0
    %439 = vmatpush1.msra.mxu0 0.0
    %440 = vmatprep.subr.mxu0 0.0
    %441 = vmatpush1.msra.mxu0 0.0
    %442 = vmatprep.subr.mxu0 0.0
    %443 = vmatpush1.msra.mxu0 0.0
    %444 = vmatprep.subr.mxu0 0.0
    %445 = vmatpush1.msra.mxu0 0.0
    %446 = vmatprep.subr.mxu0 0.0
    %447 = vmatpush1.msra.mxu0 0.0
    %448 = vmatprep.subr.mxu0 0.0
    %449 = vmatpush1.msra.mxu0 0.0
    %450 = vmatprep.subr.mxu0 0.0
    %451 = vmatpush1.msra.mxu0 0.0
    %452 = vmatprep.mubr.f32.mxu0 0.0
    %453 = vmatmul.mubr.f32.gmra.mrb[0].mxu0 %v364
    %v454 = vpop.f32.mrb[0].mxu0
    %v455 = vadd.f32 %v386, %v454
    %v456 = vpop.f32.mrb[0].mxu0
    %457 = vdwg.mxu0
    %v458 = vtanh.pop %v455
    %459 = vst [vmem:[#allocation10] sm:$0xff] %v458
    // Predicated region
    $region42: #{tpu_custom_call.1} parent=1 // pred_check
      _
    $region43: #{tpu_custom_call.1} parent=1 // pred_check_branch
      %461 = sbr.rel (0) target = $region45
    $region44: #{tpu_custom_call.1} parent=1 // pred_region
      %s463 = ssub.s32 128, 128
      %464 = vsyncadd [#allocation4], %s463
      %s466 = sshll.u32 [#allocation10], 4
      %s467 = int_to_ptr.vmem [resolvable:$true] %s466
      %469 = dma.vmem_to_hbm [thread:$0]  %s467, 128, %s6, [#allocation4]
    $region45: #{tpu_custom_call.1} parent=1 // pred_fallthru
      _
    // Predicated region
    $region46: #{tpu_custom_call.1} parent=1 // pred_check
      _
    $region47: #{tpu_custom_call.1} parent=1 // pred_check_branch
      %471 = sbr.rel (0) target = $region49
    $region48: #{tpu_custom_call.1} parent=1 // pred_region
      %472 = dma.done [#allocation4], 128
    $region49: #{tpu_custom_call.1} parent=1 // pred_fallthru
      _
    %473 = vsyncpa [#allocation3], 1
    %474 = vsyncpa [#allocation6], 1
    %475 = vsyncpa [#allocation9], 1
    %476 = vsyncpa [#allocation4], 1

</llo_original>
